<compile_context>
chip_gen: v7x
topology: tpu7x:2x2x1
jax: 0.10.0
libtpu: 0.0.40
codegen_flags: <defaults>
</compile_context>

<pallas_src>
import functools

import jax
import jax.numpy as jnp
from jax.experimental import pallas as pl
from jax.experimental.pallas import tpu as pltpu

_LANES = 128
_TARGET_BLOCK_BYTES = 2 * 1024 * 1024   # ~2 MiB of slab per grid step
_VMEM_LIMIT = 32 * 1024 * 1024          # safe on v5e / v6e / v7x


def _clamp_round(x, cv, cvn, scale, zp, d):
    """clamp -> linear_quantize -> optional bit reduction (f32, VPU only)."""
    # Upper clip then lower clip (same order as the torch.where pair);
    # min/max are single VPU ops vs cmp+select for where.
    y = jnp.maximum(jnp.minimum(x, cv), cvn)
    out_h = jnp.round(scale * y - zp)           # round-half-to-even == torch.round
    if d != 1:
        # d is a power of two -> multiply by exact reciprocal == divide
        out_l = jnp.floor(out_h * (1.0 / d)) * float(d)
    else:
        out_l = out_h
    return out_h, out_l


def _stats_kernel(params_ref, x_ref, sums_ref, *, d, use_input_mean):
    """Read-only stats pass: two RAW partial sums per tile, merged output.

    rows 0:8  -> partial sum of (x if use_input_mean else out_h)
    rows 8:16 -> partial sum of out_l
    Sums reduce only the leading (row-block) axis: pure vreg adds, no XLU
    cross-lane reduce; the wrapper finishes the reduction and applies the
    affine dequant once on scalars.
    """
    cv = params_ref[0]
    cvn = params_ref[1]
    scale = params_ref[2]
    zp = params_ref[3]

    x = x_ref[...].astype(jnp.float32)
    br = x.shape[0]

    out_h, out_l = _clamp_round(x, cv, cvn, scale, zp, d)
    a = x if use_input_mean else out_h

    sums_ref[0:8, :] = a.reshape(br // 8, 8, _LANES).sum(axis=0)
    sums_ref[8:16, :] = out_l.reshape(br // 8, 8, _LANES).sum(axis=0)


def _quant_out_kernel(params_ref, x_ref, o_ref, *, d, dequantize):
    """Fused output pass: clamp -> quantize -> bit-reduce -> (out_l*A + B)."""
    cv = params_ref[0]
    cvn = params_ref[1]
    scale = params_ref[2]
    zp = params_ref[3]

    x = x_ref[...].astype(jnp.float32)
    _, out_l = _clamp_round(x, cv, cvn, scale, zp, d)
    if dequantize:
        # A = inv_scale * factor, B = zp * inv_scale * factor (precomputed).
        res = out_l * params_ref[4] + params_ref[5]
    else:
        res = out_l
    o_ref[...] = res.astype(o_ref.dtype)


def learned_twosided_clipped_linear_quantization(
        x, clip_val, clip_valn, num_bits,
        num_bits_test=-1, dequantize=True, mean_aligned=False):
    orig_shape = x.shape
    orig_dtype = x.dtype

    if num_bits == 32:
        return x
    if num_bits == 1:
        # TODO(synk): trivial elementwise sign path kept in plain JAX.
        return jnp.sign(x).astype(orig_dtype)

    nbt = num_bits if num_bits_test == -1 else num_bits_test
    d = int(2 ** (num_bits - nbt))

    cv = jnp.asarray(clip_val, jnp.float32).reshape(-1)[0]
    cvn = jnp.asarray(clip_valn, jnp.float32).reshape(-1)[0]

    # asymmetric_linear_quantization_params(num_bits, clip_valn, clip_val,
    #                                       integral_zero_point=False, signed=False)
    n = float(2 ** num_bits - 1)
    sat_min = jnp.minimum(cvn, 0.0)
    sat_max = jnp.maximum(cv, 0.0)
    diff = sat_max - sat_min
    diff = jnp.where(diff == 0.0, n, diff)
    scale = n / diff
    zero_point = scale * sat_min
    inv_scale = 1.0 / scale

    # Keep data in its original dtype end-to-end when TPU-friendly (halves HBM
    # traffic for bf16); the f32 cast happens inside the kernels.
    slab_dtype = orig_dtype if orig_dtype in (jnp.float32, jnp.bfloat16) else jnp.float32
    itemsize = jnp.dtype(slab_dtype).itemsize
    row_align = 8 * (4 // itemsize)                      # 8 for f32, 16 for bf16
    max_block_rows = max(row_align, _TARGET_BLOCK_BYTES // (_LANES * itemsize))

    xf = x.reshape(-1).astype(slab_dtype)
    count = xf.shape[0]
    rows = -(-count // _LANES)
    rows = -(-rows // row_align) * row_align

    # Choose tile count first (minimal padding), keep >=2 tiles when possible
    # so both v7x TensorCores get work on the "parallel" grid axis.
    n_tiles = -(-rows // max_block_rows)
    if n_tiles < 2 and rows >= 2 * row_align:
        n_tiles = 2
    per_tile = -(-rows // n_tiles)
    block_rows = -(-per_tile // row_align) * row_align
    padded_rows = n_tiles * block_rows
    pad = padded_rows * _LANES - count
    if pad:
        # TODO(synk): replace host-side pad + epilogue slice with in-kernel
        # tail masking to avoid the extra full-tensor copies for ragged shapes.
        xf = jnp.pad(xf, (0, pad))
    xp = xf.reshape(padded_rows, _LANES)

    compiler_params = pltpu.CompilerParams(
        dimension_semantics=("parallel",),
        vmem_limit_bytes=_VMEM_LIMIT)

    # factor == 1 exactly when out_l == out_h and the numerator is m2 (default
    # config): skip the whole stats pass in that case.
    need_stats = dequantize and (mean_aligned or d != 1)

    if dequantize:
        if need_stats:
            params1 = jnp.stack([cv, cvn, scale, zero_point]).astype(jnp.float32)
            sums = pl.pallas_call(
                functools.partial(_stats_kernel, d=d, use_input_mean=mean_aligned),
                grid=(n_tiles,),
                in_specs=[
                    pl.BlockSpec(memory_space=pltpu.SMEM),                   # params
                    pl.BlockSpec((block_rows, _LANES), lambda i: (i, 0)),    # x tile
                ],
                out_specs=pl.BlockSpec((16, _LANES), lambda i: (i, 0)),
                out_shape=jax.ShapeDtypeStruct((n_tiles * 16, _LANES), jnp.float32),
                compiler_params=compiler_params,
            )(params1, xp)

            sums = sums.reshape(n_tiles, 2, 8, _LANES)
            sum_a = jnp.sum(sums[:, 0])       # raw sum of x (mean_aligned) or out_h
            sum_b = jnp.sum(sums[:, 1])       # raw sum of out_l

            if pad:
                # Padded elements are exactly 0.0; subtract their (identical)
                # analytic contribution from the raw sums instead of masking.
                z = jnp.float32(0.0)
                zy = jnp.maximum(jnp.minimum(z, cv), cvn)
                zh = jnp.round(scale * zy - zero_point)
                zl = jnp.floor(zh * (1.0 / d)) * float(d) if d != 1 else zh
                pf = jnp.float32(pad)
                if not mean_aligned:
                    sum_a = sum_a - pf * zh
                # sum of x needs no correction: padded inputs are exactly zero.
                sum_b = sum_b - pf * zl

            cnt = jnp.float32(count)
            if mean_aligned:
                numerator = sum_a / cnt                                       # m1
            else:
                numerator = (sum_a + cnt * zero_point) * inv_scale / cnt      # m2
            m3 = (sum_b + cnt * zero_point) * inv_scale / cnt                 # m3
            factor = jnp.where(m3 != 0.0, numerator / m3, jnp.float32(1.0))
        else:
            factor = jnp.float32(1.0)
        a_coeff = inv_scale * factor
        b_coeff = zero_point * inv_scale * factor
    else:
        a_coeff = jnp.float32(1.0)   # unused in the kernel
        b_coeff = jnp.float32(0.0)   # unused in the kernel

    params2 = jnp.stack([cv, cvn, scale, zero_point,
                         a_coeff, b_coeff]).astype(jnp.float32)

    y = pl.pallas_call(
        functools.partial(_quant_out_kernel, d=d, dequantize=dequantize),
        grid=(n_tiles,),
        in_specs=[
            pl.BlockSpec(memory_space=pltpu.SMEM),                   # params
            pl.BlockSpec((block_rows, _LANES), lambda i: (i, 0)),    # x tile
        ],
        out_specs=pl.BlockSpec((block_rows, _LANES), lambda i: (i, 0)),
        out_shape=jax.ShapeDtypeStruct((padded_rows, _LANES), slab_dtype),
        compiler_params=compiler_params,
    )(params2, xp)

    if pad:
        y = y.reshape(-1)[:count]
    return y.reshape(orig_shape).astype(orig_dtype)


def _reference_forward(x, clip_val, clip_valn, num_bits,
                       num_bits_test=-1, dequantize=True, mean_aligned=False):
    """Pure-JAX transcription of the PyTorch forward for verification."""
    cv = jnp.asarray(clip_val, jnp.float32).reshape(-1)[0]
    cvn = jnp.asarray(clip_valn, jnp.float32).reshape(-1)[0]
    m1 = jnp.mean(x)
    n = float(2 ** num_bits - 1)
    sat_min = jnp.minimum(cvn, 0.0)
    sat_max = jnp.maximum(cv, 0.0)
    diff = jnp.where(sat_max - sat_min == 0.0, n, sat_max - sat_min)
    scale = n / diff
    zp = scale * sat_min
    out = jnp.where(x > cv, cv, x)
    out = jnp.where(out < cvn, cvn, out)
    out_h = jnp.round(scale * out - zp)
    m2 = jnp.mean((out_h + zp) / scale)
    nbt = num_bits if num_bits_test == -1 else num_bits_test
    d = int(2 ** (num_bits - nbt))
    out_l = jnp.floor(out_h / d) * d if d != 1 else out_h
    if dequantize:
        out = (out_l + zp) / scale
        m3 = jnp.mean(out)
        num = m1 if mean_aligned else m2
        out = jnp.where(m3 != 0.0, out * num / m3, out)
    else:
        out = out_l
    return out


if __name__ == "__main__":
    key = jax.random.PRNGKey(0)
    x = jax.random.normal(key, (2, 4, 16, 16), dtype=jnp.float32) * 4.0

    # Deterministic "learned" clip parameters (shape [1], as in PACT init).
    clip_val = jnp.array([6.0], dtype=jnp.float32)
    clip_valn = jnp.array([-6.0], dtype=jnp.float32)

    # Case 1: defaults (num_bits=4, num_bits_test=-1, dequantize=True)
    #         -> stats pass skipped, factor == 1 exactly.
    out = learned_twosided_clipped_linear_quantization(
        x, clip_val, clip_valn, num_bits=4)
    out = jax.block_until_ready(out)
    ref = _reference_forward(x, clip_val, clip_valn, num_bits=4)
    assert out.shape == x.shape and out.dtype == x.dtype
    assert jnp.allclose(out, ref, rtol=1e-5, atol=1e-5)

    # Case 2: reduced test bit-width (d != 1 path -> stats pass runs)
    out2 = learned_twosided_clipped_linear_quantization(
        x, clip_val, clip_valn, num_bits=4, num_bits_test=2)
    out2 = jax.block_until_ready(out2)
    ref2 = _reference_forward(x, clip_val, clip_valn, num_bits=4,
                              num_bits_test=2)
    assert jnp.allclose(out2, ref2, rtol=1e-5, atol=1e-5)

    # Case 3: quantize-only path (dequantize=False -> single fused pass)
    out3 = learned_twosided_clipped_linear_quantization(
        x, clip_val, clip_valn, num_bits=4, num_bits_test=2, dequantize=False)
    out3 = jax.block_until_ready(out3)
    ref3 = _reference_forward(x, clip_val, clip_valn, num_bits=4,
                              num_bits_test=2, dequantize=False)
    assert jnp.allclose(out3, ref3, rtol=1e-5, atol=1e-5)

    # Case 4: ragged shape (exercises the padding correction) + mean_aligned
    x2 = jax.random.normal(jax.random.PRNGKey(0), (3, 5, 7, 11),
                           dtype=jnp.float32) * 2.0 + 1.5
    out4 = learned_twosided_clipped_linear_quantization(
        x2, clip_val, clip_valn, num_bits=4, num_bits_test=3, mean_aligned=True)
    out4 = jax.block_until_ready(out4)
    ref4 = _reference_forward(x2, clip_val, clip_valn, num_bits=4,
                              num_bits_test=3, mean_aligned=True)
    assert out4.shape == x2.shape and out4.dtype == x2.dtype
    assert jnp.allclose(out4, ref4, rtol=1e-4, atol=1e-5)

    # Case 5: mean_aligned with d == 1 (stats pass with x-mean numerator)
    out5 = learned_twosided_clipped_linear_quantization(
        x2, clip_val, clip_valn, num_bits=4, mean_aligned=True)
    out5 = jax.block_until_ready(out5)
    ref5 = _reference_forward(x2, clip_val, clip_valn, num_bits=4,
                              mean_aligned=True)
    assert jnp.allclose(out5, ref5, rtol=1e-4, atol=1e-5)

    print("KERNEL_OK")
</pallas_src>

<mosaic_0001>
module attributes {stable_mosaic.version = 11 : i64} {
  func.func @_quant_out_kernel(%arg0: i32, %arg1: memref<6xf32, #tpu.memory_space<smem>>, %arg2: memref<8x128xf32, #tpu.memory_space<vmem>>, %arg3: memref<8x128xf32, #tpu.memory_space<vmem>>) attributes {dimension_semantics = [#tpu.dimension_semantics<parallel>], iteration_bounds = array<i64: 2>, scalar_prefetch = 0 : i64, scratch_operands = 0 : i64, tpu.core_type = #tpu.core_type<tc>, window_params = [{transform_indices = @transform_0, window_bounds = array<i64: 6>}, {transform_indices = @transform_1, window_bounds = array<i64: 8, 128>}, {transform_indices = @transform_2, window_bounds = array<i64: 8, 128>}]} {
    %c0 = arith.constant 0 : index
    %0 = memref.load %arg1[%c0] : memref<6xf32, #tpu.memory_space<smem>>
    %c1 = arith.constant 1 : index
    %1 = memref.load %arg1[%c1] : memref<6xf32, #tpu.memory_space<smem>>
    %c2 = arith.constant 2 : index
    %2 = memref.load %arg1[%c2] : memref<6xf32, #tpu.memory_space<smem>>
    %c3 = arith.constant 3 : index
    %3 = memref.load %arg1[%c3] : memref<6xf32, #tpu.memory_space<smem>>
    %c0_0 = arith.constant 0 : index
    %c0_1 = arith.constant 0 : index
    %4 = vector.load %arg2[%c0_0, %c0_1] : memref<8x128xf32, #tpu.memory_space<vmem>>, vector<8x128xf32>
    %5 = vector.broadcast %0 : f32 to vector<8x128xf32>
    %6 = arith.minimumf %4, %5 : vector<8x128xf32>
    %7 = vector.broadcast %1 : f32 to vector<8x128xf32>
    %8 = arith.maximumf %6, %7 : vector<8x128xf32>
    %9 = vector.broadcast %2 : f32 to vector<8x128xf32>
    %10 = arith.mulf %9, %8 : vector<8x128xf32>
    %11 = vector.broadcast %3 : f32 to vector<8x128xf32>
    %12 = arith.subf %10, %11 : vector<8x128xf32>
    %13 = math.roundeven %12 : vector<8x128xf32>
    %c4 = arith.constant 4 : index
    %14 = memref.load %arg1[%c4] : memref<6xf32, #tpu.memory_space<smem>>
    %15 = vector.broadcast %14 : f32 to vector<8x128xf32>
    %16 = arith.mulf %13, %15 : vector<8x128xf32>
    %c5 = arith.constant 5 : index
    %17 = memref.load %arg1[%c5] : memref<6xf32, #tpu.memory_space<smem>>
    %18 = vector.broadcast %17 : f32 to vector<8x128xf32>
    %19 = arith.addf %16, %18 : vector<8x128xf32>
    %c0_2 = arith.constant 0 : index
    %c0_3 = arith.constant 0 : index
    %20 = vector.load %arg3[%c0_2, %c0_3] : memref<8x128xf32, #tpu.memory_space<vmem>>, vector<8x128xf32>
    tpu.vector_store %arg3[%c0_2, %c0_3], %19 {strides = array<i32>} : memref<8x128xf32, #tpu.memory_space<vmem>>, vector<8x128xf32>,
    return
  }
  func.func @transform_0(%arg0: i32) -> i32 {
    %c0_i32 = arith.constant 0 : i32
    %c0_i32_0 = arith.constant 0 : i32
    return %c0_i32 : i32
  }
  func.func @transform_1(%arg0: i32) -> (i32, i32) {
    %c0_i32 = arith.constant 0 : i32
    %c0_i32_0 = arith.constant 0 : i32
    return %arg0, %c0_i32 : i32, i32
  }
  func.func @transform_2(%arg0: i32) -> (i32, i32) {
    %c0_i32 = arith.constant 0 : i32
    %c0_i32_0 = arith.constant 0 : i32
    return %arg0, %c0_i32 : i32, i32
  }
}

</mosaic_0001>

<llo_original>
// kernel: tpu_custom_call.1
$region0: #{tpu_custom_call.1}
  #allocation0 [shape = 'u32[]', space=smem, size = 0x4, offset = 0x4, fixed_abs, tag = 'smem constant byte address 0x4 - core index']
  #allocation1 [shape = 'u32[144,128]{1,0:T(1,128)}', space=vmem, size = 0x12000, scoped, tag = 'internal scratch']
  %s0 = inlined_call_operand.hbm [shape: f32[6], index: 0, kind: input, shape index: {}]
  %s1 = inlined_call_operand.hbm [shape: f32[16,128], index: 1, kind: input, shape index: {}]
  %s2 = inlined_call_operand.hbm [shape: f32[16,128], index: 2, kind: output, shape index: {}]
  %s3 = sld [smem:[#allocation0]]
  $region49: #{tpu_custom_call.1} parent=0
    _
  %s5 = ssub.s32 1, %s3
  %s6 = scalar_select 0, %s5, %s3
  $region1: #{tpu_custom_call.1} parent=0
    #allocation2 [shape = 'u8[512]{0}', space=smem, size = 0x200, scoped, tag = 'input window, operand 0, single buffered']
    #allocation3 [shape = 's32[2]{0}', space=sflag, size = 0x8, scoped, tag = 'scoped memory for tpu_custom_call.1']
    #allocation4 [shape = 's32[2]{0}', space=sflag, size = 0x8, scoped, tag = 'scoped memory for tpu_custom_call.1']
    #allocation5 [shape = 's32[2]{0}', space=sflag, size = 0x8, scoped, tag = 'scoped memory for tpu_custom_call.1']
    #allocation6 [shape = 'u8[8192]{0}', space=vmem, size = 0x2000, scoped, tag = 'input window, operand 1']
    #allocation7 [shape = 'u8[8192]{0}', space=vmem, size = 0x2000, scoped, tag = 'output window, operand 0']
    %7 = vsyncpa [#allocation5], 0
    %8 = vsyncpa [#allocation3], 0
    %s9 = scalar_lea.sflag [#allocation3], 1
    %10 = vsyncpa %s9, 0
    %11 = vsyncpa [#allocation4], 0
    %s12 = scalar_lea.sflag [#allocation4], 1
    %13 = vsyncpa %s12, 0
    loop: start=0, step=1, limit=4
    $region2: #{tpu_custom_call.1} parent=1 // loop_pre_header
      _
    $region3: #{tpu_custom_call.1} parent=1 // loop_header
      %s15 = sphi 0, %s19
      %p16 = scmp.ge.s32.totalorder %s15, 4
      %s23 = sphi 0, %s23
      %s25 = sphi 0, %s23
      %s26 = sphi 0, %s25
      %s40 = sphi 0, %s26
      %s46 = sphi 0, %s48
      %s49 = sphi 0, %s46
      %s50 = sphi 0, %s49
      %s66 = sphi 0, %s50
      %s72 = sphi 0, %s74
      %s75 = sphi 0, %s72
      %s76 = sphi 0, %s75
      %s92 = sphi 0, %s76
    $region4: #{tpu_custom_call.1} parent=1 // loop_header_branch
      %18 = sbr.rel (%p16) target = $region8
    $region5: #{tpu_custom_call.1} parent=1 // loop_body
      %s20 = ssub.s32 %s15, 1
      %s21 = ssub.s32 %s15, 2
      %s22 = sadd.s32 %s15, 1
      %s24 = sadd.s32 %s23, 1
      %p27 = scmp.eq.s32.totalorder %s15, 1
      %p28 = scmp.ne.s32.totalorder %s23, %s25
      %p29 = scmp.eq.s32.totalorder %s15, 0
      %p30 = por %p28, %p29
      %p31 = scmp.ne.s32.totalorder %s23, %s25
      %p32 = scmp.eq.s32.totalorder %s20, 1
      %p33 = por %p31, %p32
      %p34 = scmp.ne.s32.totalorder %s25, %s26
      %p35 = scmp.eq.s32.totalorder %s20, 0
      %p36 = por %p34, %p35
      %p37 = scmp.ne.s32.totalorder %s25, %s26
      %p38 = scmp.eq.s32.totalorder %s21, 1
      %p39 = por %p37, %p38
      %p41 = scmp.ne.s32.totalorder %s26, %s40
      %p42 = scmp.eq.s32.totalorder %s21, 0
      %p43 = por %p41, %p42
      %s44 = ssub.s32 %s15, %s22
      %p45 = scmp.eq.s32.totalorder %s44, 0
      %s47 = sadd.s32 %s46, 1
      %s48 = scalar_select %p45, %s46, %s47
      %p51 = pneg %p45
      %p52 = scmp.eq.s32.totalorder %s15, 1
      %p53 = por %p51, %p52
      %p54 = scmp.ne.s32.totalorder %s46, %s49
      %p55 = scmp.eq.s32.totalorder %s15, 0
      %p56 = por %p54, %p55
      %p57 = scmp.ne.s32.totalorder %s46, %s49
      %p58 = scmp.eq.s32.totalorder %s20, 1
      %p59 = por %p57, %p58
      %p60 = scmp.ne.s32.totalorder %s49, %s50
      %p61 = scmp.eq.s32.totalorder %s20, 0
      %p62 = por %p60, %p61
      %p63 = scmp.ne.s32.totalorder %s49, %s50
      %p64 = scmp.eq.s32.totalorder %s21, 1
      %p65 = por %p63, %p64
      %p67 = scmp.ne.s32.totalorder %s50, %s66
      %p68 = scmp.eq.s32.totalorder %s21, 0
      %p69 = por %p67, %p68
      %s70 = ssub.s32 %s15, %s22
      %p71 = scmp.eq.s32.totalorder %s70, 0
      %s73 = sadd.s32 %s72, 1
      %s74 = scalar_select %p71, %s72, %s73
      %p77 = pneg %p71
      %p78 = scmp.eq.s32.totalorder %s15, 1
      %p79 = por %p77, %p78
      %p80 = scmp.ne.s32.totalorder %s72, %s75
      %p81 = scmp.eq.s32.totalorder %s15, 0
      %p82 = por %p80, %p81
      %p83 = scmp.ne.s32.totalorder %s72, %s75
      %p84 = scmp.eq.s32.totalorder %s20, 1
      %p85 = por %p83, %p84
      %p86 = scmp.ne.s32.totalorder %s75, %s76
      %p87 = scmp.eq.s32.totalorder %s20, 0
      %p88 = por %p86, %p87
      %p89 = scmp.ne.s32.totalorder %s75, %s76
      %p90 = scmp.eq.s32.totalorder %s21, 1
      %p91 = por %p89, %p90
      %p93 = scmp.ne.s32.totalorder %s76, %s92
      %p94 = scmp.eq.s32.totalorder %s21, 0
      %p95 = por %p93, %p94
      %p96 = scmp.le.s32.totalorder 1, %s15
      %p97 = scmp.lt.s32.totalorder %s15, 3
      %p98 = pnand %p96, %p97
      %p99 = pneg %p98
      // Predicated region
      $region9: #{tpu_custom_call.1} parent=5 // pred_check
        _
      $region10: #{tpu_custom_call.1} parent=5 // pred_check_branch
        %101 = sbr.rel (%p98) target = $region12
      $region11: #{tpu_custom_call.1} parent=5 // pred_region
        %s102 = ssub.s32 %s15, 1
        // Predicated region
        $region13: #{tpu_custom_call.1} parent=11 // pred_check
          %p103 = pneg %p36
        $region14: #{tpu_custom_call.1} parent=11 // pred_check_branch
          %105 = sbr.rel (%p103) target = $region16
        $region15: #{tpu_custom_call.1} parent=11 // pred_region
          %s107 = ssub.s32 16, 16
          %108 = vsyncadd [#allocation5], %s107
          %111 = dma.hbm_to_smem %s0, 16, [#allocation2], [#allocation5]
        $region16: #{tpu_custom_call.1} parent=11 // pred_fallthru
          _
      $region12: #{tpu_custom_call.1} parent=5 // pred_fallthru
        _
      %p112 = scmp.lt.s32.totalorder %s15, 2
      // Predicated region
      $region17: #{tpu_custom_call.1} parent=5 // pred_check
        %p113 = pneg %p112
      $region18: #{tpu_custom_call.1} parent=5 // pred_check_branch
        %115 = sbr.rel (%p113) target = $region20
      $region19: #{tpu_custom_call.1} parent=5 // pred_region
        // Predicated region
        $region21: #{tpu_custom_call.1} parent=19 // pred_check
          %p116 = pneg %p56
        $region22: #{tpu_custom_call.1} parent=19 // pred_check_branch
          %118 = sbr.rel (%p116) target = $region24
        $region23: #{tpu_custom_call.1} parent=19 // pred_region
          %s119 = sand.u32 %s46, 1
          %s120 = scalar_lea.sflag [#allocation3], %s119
          %s121 = sand.u32 %s46, 1
          %s122 = smul.addr %s121, 8
          %s123 = scalar_lea.vmem [#allocation6], %s122
          %s125 = ssub.s32 128, 128
          %126 = vsyncadd %s120, %s125
          %s127 = smul.addr %s15, 128
          %s128 = scalar_lea.hbm %s1, %s127
          %s130 = sshll.u32 %s123, 4
          %s131 = int_to_ptr.vmem [resolvable:$true] %s130
          %133 = dma.hbm_to_vmem [thread:$0]  %s128, 128, %s131, %s120
        $region24: #{tpu_custom_call.1} parent=19 // pred_fallthru
          _
      $region20: #{tpu_custom_call.1} parent=5 // pred_fallthru
        _
      %p134 = scmp.le.s32.totalorder 1, %s15
      %p135 = scmp.lt.s32.totalorder %s15, 3
      %p136 = pnand %p134, %p135
      %p137 = pneg %p136
      // Predicated region
      $region25: #{tpu_custom_call.1} parent=5 // pred_check
        _
      $region26: #{tpu_custom_call.1} parent=5 // pred_check_branch
        %139 = sbr.rel (%p136) target = $region28
      $region27: #{tpu_custom_call.1} parent=5 // pred_region
        %s140 = ssub.s32 %s15, 1
        // Predicated region
        $region29: #{tpu_custom_call.1} parent=27 // pred_check
          %p141 = pneg %p36
        $region30: #{tpu_custom_call.1} parent=27 // pred_check_branch
          %143 = sbr.rel (%p141) target = $region32
        $region31: #{tpu_custom_call.1} parent=27 // pred_region
          %144 = dma.done [#allocation5], 16
        $region32: #{tpu_custom_call.1} parent=27 // pred_fallthru
          _
        %s145 = sand.u32 %s49, 1
        %s146 = scalar_lea.sflag [#allocation3], %s145
        %s147 = sand.u32 %s49, 1
        %s148 = smul.addr %s147, 8
        %s149 = scalar_lea.vmem [#allocation6], %s148
        // Predicated region
        $region33: #{tpu_custom_call.1} parent=27 // pred_check
          %p150 = pneg %p62
        $region34: #{tpu_custom_call.1} parent=27 // pred_check_branch
          %152 = sbr.rel (%p150) target = $region36
        $region35: #{tpu_custom_call.1} parent=27 // pred_region
          %153 = dma.done %s146, 128
        $region36: #{tpu_custom_call.1} parent=27 // pred_fallthru
          _
        %154 = sfence
        %p155 = pneg %p36
        %p156 = pneg %p33
        %s157 = sand.u32 %s49, 1
        %s158 = scalar_lea.sflag [#allocation3], %s157
        %s159 = sand.u32 %s49, 1
        %s160 = smul.addr %s159, 8
        %s161 = scalar_lea.vmem [#allocation6], %s160
        %p162 = pneg %p62
        %p163 = pneg %p59
        %p164 = pneg %p88
        %p165 = pneg %p85
        %s166 = sand.u32 %s75, 1
        %s167 = scalar_lea.sflag [#allocation4], %s166
        %s168 = sand.u32 %s75, 1
        %s169 = smul.addr %s168, 8
        %s170 = scalar_lea.vmem [#allocation7], %s169
        %s171 = sld [smem:[#allocation2]]
        %s172 = sld [smem:[#allocation2 + $0x1]]
        %s173 = sld [smem:[#allocation2 + $0x2]]
        %s174 = sld [smem:[#allocation2 + $0x3]]
        %v175 = vld [vmem:[%s149] sm:$0xff]
        %v176 = vstv %s171
        %v177 = vmin.f32 %v175, %v176
        %v178 = vstv %s172
        %v179 = vmax.f32 %v177, %v178
        %v180 = vstv %s173
        %v181 = vmul.f32 %v180, %v179
        %v182 = vstv %s174
        %v183 = vsub.f32 %v181, %v182
        %v184 = vround.ne.pseudo %v183
        %s185 = sld [smem:[#allocation2 + $0x4]]
        %v186 = vstv %s185
        %v187 = vmul.f32 %v184, %v186
        %s188 = sld [smem:[#allocation2 + $0x5]]
        %v189 = vstv %s188
        %v190 = vadd.f32 %v187, %v189
        %191 = vst [vmem:[%s170] sm:$0xff] %v190
        %s192 = sand.u32 %s75, 1
        %s193 = scalar_lea.sflag [#allocation4], %s192
        %s194 = sand.u32 %s75, 1
        %s195 = smul.addr %s194, 8
        %s196 = scalar_lea.vmem [#allocation7], %s195
        // Predicated region
        $region37: #{tpu_custom_call.1} parent=27 // pred_check
          %p197 = pneg %p85
        $region38: #{tpu_custom_call.1} parent=27 // pred_check_branch
          %199 = sbr.rel (%p197) target = $region40
        $region39: #{tpu_custom_call.1} parent=27 // pred_region
          %s201 = ssub.s32 128, 128
          %202 = vsyncadd %s193, %s201
          %s203 = smul.addr %s20, 128
          %s204 = scalar_lea.hbm %s2, %s203
          %s206 = sshll.u32 %s196, 4
          %s207 = int_to_ptr.vmem [resolvable:$true] %s206
          %209 = dma.vmem_to_hbm [thread:$0]  %s207, 128, %s204, %s193
        $region40: #{tpu_custom_call.1} parent=27 // pred_fallthru
          _
      $region28: #{tpu_custom_call.1} parent=5 // pred_fallthru
        _
      %p210 = scmp.le.s32.totalorder 2, %s15
      // Predicated region
      $region41: #{tpu_custom_call.1} parent=5 // pred_check
        %p211 = pneg %p210
      $region42: #{tpu_custom_call.1} parent=5 // pred_check_branch
        %213 = sbr.rel (%p211) target = $region44
      $region43: #{tpu_custom_call.1} parent=5 // pred_region
        %s214 = ssub.s32 %s15, 2
        // Predicated region
        $region45: #{tpu_custom_call.1} parent=43 // pred_check
          %p215 = pneg %p91
        $region46: #{tpu_custom_call.1} parent=43 // pred_check_branch
          %217 = sbr.rel (%p215) target = $region48
        $region47: #{tpu_custom_call.1} parent=43 // pred_region
          %s218 = sand.u32 %s76, 1
          %s219 = scalar_lea.sflag [#allocation4], %s218
          %s220 = sand.u32 %s76, 1
          %s221 = smul.addr %s220, 8
          %s222 = scalar_lea.vmem [#allocation7], %s221
          %223 = dma.done %s219, 128
        $region48: #{tpu_custom_call.1} parent=43 // pred_fallthru
          _
      $region44: #{tpu_custom_call.1} parent=5 // pred_fallthru
        _
    $region6: #{tpu_custom_call.1} parent=1 // loop_footer
      %s19 = sadd.s32 1, %s15
    $region7: #{tpu_custom_call.1} parent=1 // loop_footer_branch
      %14 = sbr.rel target = $region3
    $region8: #{tpu_custom_call.1} parent=1 // loop_exit
      _
    %224 = vsyncpa [#allocation3], 1
    %s225 = scalar_lea.sflag [#allocation3], 1
    %226 = vsyncpa %s225, 1
    %227 = vsyncpa [#allocation4], 1
    %s228 = scalar_lea.sflag [#allocation4], 1
    %229 = vsyncpa %s228, 1
    %230 = vsyncpa [#allocation5], 1
    %s231 = scalar_lea.sflag [#allocation5], 1
    %232 = vsyncpa %s231, 1

</llo_original>
